<compile_context>
chip_gen: v7x
topology: tpu7x:2x2x1
jax: 0.10.0
libtpu: 0.0.40
codegen_flags: <defaults>
</compile_context>

<pallas_src>
import jax
import jax.numpy as jnp
from jax.experimental import pallas as pl
from jax.experimental.pallas import tpu as pltpu


def decoder_quad_kernel(za_ref, z_ref, w_ref, b_ref, o_ref):
    za = za_ref[...]                    # (TB, 1+L) f32 : [1 | z]
    z = z_ref[...]                      # (TB, L)   f32
    tb, la = za.shape
    l = z.shape[1]
    # z_all = [z | kron(z, z)], born lane-major in a single outer product:
    #   ([1 | z] (x) z)[b, i*L + j] = za[b, i] * z[b, j]
    #   i = 0   -> rows 0..L-1      = z
    #   i >= 1  -> rows L..L+L^2-1  = kron(z, z)
    z_all = (za[:, :, None] * z[:, None, :]).reshape(tb, la * l)     # (TB, L+L^2) f32
    # One fused MXU matmul in the weights' storage dtype (bf16), f32 accumulation.
    h = jnp.dot(z_all.astype(w_ref.dtype), w_ref[...],
                preferred_element_type=jnp.float32)                  # (TB, 512) f32
    o_ref[...] = (h + b_ref[...]).astype(o_ref.dtype)                # f32 bias add


def decoder_quad(z, w, b, *, block_b=None):
    """h = [z | kron(z, z)] @ w + b.

    z : (B, L) f32
    w : (L + L^2, O) — transposed Linear weight; bf16 storage recommended
    b : (1, O) or (O,) f32
    """
    B, L = z.shape
    K, O = w.shape
    assert K == L + L * L, "weight must have L + L^2 input rows"
    b = b.reshape(1, O).astype(jnp.float32)

    # Constant-1 column appended outside the kernel (layout plumbing) so the
    # kernel needs no in-kernel concatenate to form z_all.
    z_aug = jnp.concatenate([jnp.ones((B, 1), z.dtype), z], axis=-1)  # (B, 1+L)

    # Batch tiling: multiple of 8 rows per step when B is large (MXU rows /
    # (8,128) rule), otherwise one full-batch block.
    if block_b is None:
        block_b = 256 if B % 256 == 0 else (128 if B % 128 == 0 else B)
    assert B % block_b == 0
    grid = (B // block_b,)

    return pl.pallas_call(
        decoder_quad_kernel,
        out_shape=jax.ShapeDtypeStruct((B, O), jnp.float32),
        grid=grid,
        in_specs=[
            pl.BlockSpec((block_b, 1 + L), lambda i: (i, 0)),   # [1 | z] tile
            pl.BlockSpec((block_b, L), lambda i: (i, 0)),       # z tile
            pl.BlockSpec((K, O), lambda i: (0, 0)),             # W resident across tiles
            pl.BlockSpec((1, O), lambda i: (0, 0)),             # bias resident
        ],
        out_specs=pl.BlockSpec((block_b, O), lambda i: (i, 0)),  # O=512: lane-dense vst
        compiler_params=pltpu.CompilerParams(
            dimension_semantics=("parallel",)),                  # batch tiles -> both TCs (v7x)
    )(z_aug, z, w, b)


if __name__ == "__main__":
    latent_dim = 8
    batch = 2
    out_features = 512
    in_features = latent_dim + latent_dim ** 2  # 72

    key = jax.random.PRNGKey(0)
    kz, kw, kb = jax.random.split(key, 3)

    # Deterministic PyTorch-style init: U(-1/sqrt(fan_in), 1/sqrt(fan_in)).
    bound = 1.0 / (in_features ** 0.5)
    w_f32 = jax.random.uniform(kw, (in_features, out_features),
                               minval=-bound, maxval=bound, dtype=jnp.float32)
    b_f32 = jax.random.uniform(kb, (1, out_features),
                               minval=-bound, maxval=bound, dtype=jnp.float32)
    z = jax.random.normal(kz, (batch, latent_dim), dtype=jnp.float32)

    # Weights stored in bf16 in HBM (halves the dominant weight-DMA term).
    w_bf16 = w_f32.astype(jnp.bfloat16)

    out = decoder_quad(z, w_bf16, b_f32)
    out = jax.block_until_ready(out)
    assert out.shape == (batch, out_features)

    # Reference A: identical numeric path (bf16 weights, bf16 dot operands, f32 accum).
    z2 = (z[:, :, None] * z[:, None, :]).reshape(batch, latent_dim * latent_dim)
    z_all = jnp.concatenate([z, z2], axis=-1)
    ref_bf16 = jnp.dot(z_all.astype(jnp.bfloat16), w_bf16,
                       preferred_element_type=jnp.float32) + b_f32
    assert jnp.allclose(out, ref_bf16, atol=1e-3, rtol=1e-3), "mismatch vs bf16-path reference"

    # Reference B: original full-f32 module math (difference = bf16 weight storage only).
    ref_f32 = jnp.dot(z_all, w_f32, preferred_element_type=jnp.float32) + b_f32
    assert jnp.allclose(out, ref_f32, atol=1e-1, rtol=1e-1), "mismatch vs f32 reference"

    print("KERNEL_OK")
</pallas_src>

<mosaic_0001>
module attributes {stable_mosaic.version = 11 : i64} {
  func.func @decoder_quad_kernel(%arg0: i32, %arg1: memref<2x9xf32, #tpu.memory_space<vmem>>, %arg2: memref<2x8xf32, #tpu.memory_space<vmem>>, %arg3: memref<72x512xbf16, #tpu.memory_space<vmem>>, %arg4: memref<1x512xf32, #tpu.memory_space<vmem>>, %arg5: memref<2x512xf32, #tpu.memory_space<vmem>>) attributes {dimension_semantics = [#tpu.dimension_semantics<parallel>], iteration_bounds = array<i64: 1>, scalar_prefetch = 0 : i64, scratch_operands = 0 : i64, tpu.core_type = #tpu.core_type<tc>, window_params = [{transform_indices = @transform_0, window_bounds = array<i64: 2, 9>}, {transform_indices = @transform_1, window_bounds = array<i64: 2, 8>}, {pipeline_mode = #tpu.pipeline_mode<synchronous>, transform_indices = @transform_2, window_bounds = array<i64: 72, 512>}, {pipeline_mode = #tpu.pipeline_mode<synchronous>, transform_indices = @transform_3, window_bounds = array<i64: 1, 512>}, {transform_indices = @transform_4, window_bounds = array<i64: 2, 512>}]} {
    %c0 = arith.constant 0 : index
    %c0_0 = arith.constant 0 : index
    %0 = vector.load %arg1[%c0, %c0_0] : memref<2x9xf32, #tpu.memory_space<vmem>>, vector<2x9xf32>
    %c0_1 = arith.constant 0 : index
    %c0_2 = arith.constant 0 : index
    %1 = vector.load %arg2[%c0_1, %c0_2] : memref<2x8xf32, #tpu.memory_space<vmem>>, vector<2x8xf32>
    %2 = vector.shape_cast %0 : vector<2x9xf32> to vector<2x9x1xf32>
    %3 = vector.shape_cast %1 : vector<2x8xf32> to vector<2x1x8xf32>
    %4 = vector.broadcast %2 : vector<2x9x1xf32> to vector<2x9x8xf32>
    %5 = vector.broadcast %3 : vector<2x1x8xf32> to vector<2x9x8xf32>
    %6 = arith.mulf %4, %5 : vector<2x9x8xf32>
    %7 = vector.shape_cast %6 : vector<2x9x8xf32> to vector<2x72xf32>
    %8 = arith.truncf %7 : vector<2x72xf32> to vector<2x72xbf16>
    %c0_3 = arith.constant 0 : index
    %c0_4 = arith.constant 0 : index
    %9 = vector.load %arg3[%c0_3, %c0_4] : memref<72x512xbf16, #tpu.memory_space<vmem>>, vector<72x512xbf16>
    %cst = arith.constant dense<0.000000e+00> : vector<2x512xf32>
    %10 = tpu.matmul %8, %9, %cst {dimension_numbers = #tpu.dot_dimension_numbers<[1], [0], [0], [1], [0, 0, 1, 1], [], []>} : vector<2x72xbf16>, vector<72x512xbf16>, vector<2x512xf32> -> vector<2x512xf32>
    %c0_5 = arith.constant 0 : index
    %c0_6 = arith.constant 0 : index
    %11 = vector.load %arg4[%c0_5, %c0_6] : memref<1x512xf32, #tpu.memory_space<vmem>>, vector<1x512xf32>
    %12 = vector.broadcast %11 : vector<1x512xf32> to vector<2x512xf32>
    %13 = arith.addf %10, %12 : vector<2x512xf32>
    %c0_7 = arith.constant 0 : index
    %c0_8 = arith.constant 0 : index
    %14 = vector.load %arg5[%c0_7, %c0_8] : memref<2x512xf32, #tpu.memory_space<vmem>>, vector<2x512xf32>
    tpu.vector_store %arg5[%c0_7, %c0_8], %13 {strides = array<i32>} : memref<2x512xf32, #tpu.memory_space<vmem>>, vector<2x512xf32>,
    return
  }
  func.func @transform_0(%arg0: i32) -> (i32, i32) {
    %c0_i32 = arith.constant 0 : i32
    %c0_i32_0 = arith.constant 0 : i32
    return %arg0, %c0_i32 : i32, i32
  }
  func.func @transform_1(%arg0: i32) -> (i32, i32) {
    %c0_i32 = arith.constant 0 : i32
    %c0_i32_0 = arith.constant 0 : i32
    return %arg0, %c0_i32 : i32, i32
  }
  func.func @transform_2(%arg0: i32) -> (i32, i32) {
    %c0_i32 = arith.constant 0 : i32
    %c0_i32_0 = arith.constant 0 : i32
    %c0_i32_1 = arith.constant 0 : i32
    return %c0_i32, %c0_i32_0 : i32, i32
  }
  func.func @transform_3(%arg0: i32) -> (i32, i32) {
    %c0_i32 = arith.constant 0 : i32
    %c0_i32_0 = arith.constant 0 : i32
    %c0_i32_1 = arith.constant 0 : i32
    return %c0_i32, %c0_i32_0 : i32, i32
  }
  func.func @transform_4(%arg0: i32) -> (i32, i32) {
    %c0_i32 = arith.constant 0 : i32
    %c0_i32_0 = arith.constant 0 : i32
    return %arg0, %c0_i32 : i32, i32
  }
}

</mosaic_0001>

<llo_original>
// kernel: tpu_custom_call.1
$region0: #{tpu_custom_call.1}
  #allocation0 [shape = 'u32[]', space=smem, size = 0x4, offset = 0x4, fixed_abs, tag = 'smem constant byte address 0x4 - core index']
  #allocation1 [shape = 'u32[144,128]{1,0:T(1,128)}', space=vmem, size = 0x12000, scoped, tag = 'internal scratch']
  %s0 = inlined_call_operand.hbm [shape: f32[2,9], index: 0, kind: input, shape index: {}]
  %s1 = inlined_call_operand.vmem [shape: f32[2,8], index: 1, kind: input, shape index: {}]
  %s2 = inlined_call_operand.hbm [shape: bf16[72,512], index: 2, kind: input, shape index: {}]
  %s3 = inlined_call_operand.vmem [shape: f32[1,512], index: 3, kind: input, shape index: {}]
  %s4 = inlined_call_operand.hbm [shape: f32[2,512], index: 4, kind: output, shape index: {}]
  %s5 = sld [smem:[#allocation0]]
  $region34: #{tpu_custom_call.1} parent=0
    _
  %s7 = ssub.s32 1, %s5
  %s8 = scalar_select 0, %s7, %s5
  $region1: #{tpu_custom_call.1} parent=0
    #allocation2 [shape = 'u8[1024]{0}', space=vmem, size = 0x400, scoped, tag = 'input window, operand 0, single buffered']
    #allocation3 [shape = 's32[1]{0}', space=sflag, size = 0x4, scoped, tag = 'scoped memory for tpu_custom_call.1']
    #allocation4 [shape = 's32[1]{0}', space=sflag, size = 0x4, scoped, tag = 'scoped memory for tpu_custom_call.1']
    #allocation5 [shape = 'u8[73728]{0}', space=vmem, size = 0x12000, scoped, tag = 'input window, operand 2, single buffered']
    #allocation6 [shape = 's32[1]{0}', space=sflag, size = 0x4, scoped, tag = 'scoped memory for tpu_custom_call.1']
    #allocation7 [shape = 'u8[4096]{0}', space=vmem, size = 0x1000, scoped, tag = 'output window, operand 0, single buffered']
    %9 = vsyncpa [#allocation3], 0
    %10 = vsyncpa [#allocation6], 0
    %11 = vsyncpa [#allocation4], 0
    // Predicated region
    $region2: #{tpu_custom_call.1} parent=1 // pred_check
      _
    $region3: #{tpu_custom_call.1} parent=1 // pred_check_branch
      %13 = sbr.rel (0) target = $region5
    $region4: #{tpu_custom_call.1} parent=1 // pred_region
      %s15 = ssub.s32 32, 32
      %16 = vsyncadd [#allocation3], %s15
      %s18 = sshll.u32 [#allocation2], 4
      %s19 = int_to_ptr.vmem [resolvable:$true] %s18
      %21 = dma.hbm_to_vmem [thread:$0]  %s0, 32, %s19, [#allocation3]
    $region5: #{tpu_custom_call.1} parent=1 // pred_fallthru
      _
    // Predicated region
    $region6: #{tpu_custom_call.1} parent=1 // pred_check
      _
    $region7: #{tpu_custom_call.1} parent=1 // pred_check_branch
      %23 = sbr.rel (0) target = $region9
    $region8: #{tpu_custom_call.1} parent=1 // pred_region
      _
    $region9: #{tpu_custom_call.1} parent=1 // pred_fallthru
      _
    // Predicated region
    $region10: #{tpu_custom_call.1} parent=1 // pred_check
      _
    $region11: #{tpu_custom_call.1} parent=1 // pred_check_branch
      %25 = sbr.rel (0) target = $region13
    $region12: #{tpu_custom_call.1} parent=1 // pred_region
      %s27 = ssub.s32 2304, 2304
      %28 = vsyncadd [#allocation6], %s27
      %s29 = sshll.u32 [#allocation5], 4
      %s30 = int_to_ptr.vmem [resolvable:$true] %s29
      %35 = dma.hbm_to_vmem [thread:$0]  %s2, 2304, %s30, [#allocation6], 256, 256, 16
    $region13: #{tpu_custom_call.1} parent=1 // pred_fallthru
      _
    // Predicated region
    $region14: #{tpu_custom_call.1} parent=1 // pred_check
      _
    $region15: #{tpu_custom_call.1} parent=1 // pred_check_branch
      %37 = sbr.rel (0) target = $region17
    $region16: #{tpu_custom_call.1} parent=1 // pred_region
      _
    $region17: #{tpu_custom_call.1} parent=1 // pred_fallthru
      _
    // Predicated region
    $region18: #{tpu_custom_call.1} parent=1 // pred_check
      _
    $region19: #{tpu_custom_call.1} parent=1 // pred_check_branch
      %39 = sbr.rel (0) target = $region21
    $region20: #{tpu_custom_call.1} parent=1 // pred_region
      %40 = dma.done [#allocation3], 32
    $region21: #{tpu_custom_call.1} parent=1 // pred_fallthru
      _
    // Predicated region
    $region22: #{tpu_custom_call.1} parent=1 // pred_check
      _
    $region23: #{tpu_custom_call.1} parent=1 // pred_check_branch
      %42 = sbr.rel (0) target = $region25
    $region24: #{tpu_custom_call.1} parent=1 // pred_region
      %43 = dma.done [#allocation6], 2304
    $region25: #{tpu_custom_call.1} parent=1 // pred_fallthru
      _
    %v45 = vld [vmem:[#allocation2] sm:$0x3]
    %v46 = vld [vmem:[%s1] sm:$0x3]
    %v47 = vlaneseq
    %v48 = vshrl.u32 %v47, 7
    %v49 = vsub.s32 0, %v48
    %v50 = vrot.slane %v45, %v49
    %52 = vbcast.lane.b32.xlu0 %v50, 256
    %v53 = vpop.permute.xlu0 %52
    %s55 = sor.u32 256, 8
    %56 = vbcast.lane.b32.xlu0 %v50, %s55
    %v57 = vpop.permute.xlu0 %56
    %v58 = vlaneseq
    %v59 = vshrl.u32 %v58, 7
    %v60 = vsub.s32 1, %v59
    %v61 = vrot.slane %v45, %v60
    %63 = vbcast.lane.b32.xlu0 %v61, 256
    %v64 = vpop.permute.xlu0 %63
    %s66 = sor.u32 256, 8
    %67 = vbcast.lane.b32.xlu0 %v61, %s66
    %v68 = vpop.permute.xlu0 %67
    %v71 = vunpack.c.l.s4 1966171168
    %v72 = vunpack.c.0.s8 %v71
    %v73 = vlaneseq
    %v74 = vshrl.u32 %v73, 7
    %v75 = vsub.s32 %v72, %v74
    %v76 = vrot.slane %v46, %v75
    %v77 = vcombine.high %v76, %v76
    %v79 = vunpack.c.l.s4 1966171168
    %v80 = vunpack.c.0.s8 %v79
    %v81 = vlaneseq
    %v82 = vshrl.u32 %v81, 7
    %v83 = vsub.s32 %v80, %v82
    %v84 = vrot.slane %v76, %v83
    %v86 = vunpack.c.l.s4 1966171168
    %v87 = vunpack.c.0.s8 %v86
    %v88 = vlaneseq
    %v89 = vshrl.u32 %v88, 7
    %v90 = vsub.s32 %v87, %v89
    %v91 = vrot.slane %v77, %v90
    %v92 = vlaneseq
    %v93 = vshrl.u32 %v92, 7
    %v94 = vsub.s32 0, %v93
    %v95 = vrot.slane %v84, %v94
    %v96 = vlaneseq
    %v97 = vshrl.u32 %v96, 7
    %v98 = vsub.s32 0, %v97
    %v99 = vrot.slane %v91, %v98
    %v102 = vmul.f32 %v53, %v95
    %v103 = vmul.f32 %v64, %v99
    %v104 = vcombine.high %v102, 0.0
    %v106 = vunpack.c.l.s4 1983009808
    %v107 = vunpack.c.0.s8 %v106
    %v108 = vlaneseq
    %v109 = vshrl.u32 %v108, 7
    %v110 = vsub.s32 %v107, %v109
    %v111 = vrot.slane %v102, %v110
    %v113 = vunpack.c.l.s4 1983009808
    %v114 = vunpack.c.0.s8 %v113
    %v115 = vlaneseq
    %v116 = vshrl.u32 %v115, 7
    %v117 = vsub.s32 %v114, %v116
    %v118 = vrot.slane %v104, %v117
    %v119 = vcombine.high %v103, 0.0
    %v121 = vunpack.c.l.s4 1983009808
    %v122 = vunpack.c.0.s8 %v121
    %v123 = vlaneseq
    %v124 = vshrl.u32 %v123, 7
    %v125 = vsub.s32 %v122, %v124
    %v126 = vrot.slane %v103, %v125
    %v128 = vunpack.c.l.s4 1983009808
    %v129 = vunpack.c.0.s8 %v128
    %v130 = vlaneseq
    %v131 = vshrl.u32 %v130, 7
    %v132 = vsub.s32 %v129, %v131
    %v133 = vrot.slane %v119, %v132
    %v134 = vcombine.low %v111, %v126
    %v135 = vcombine.high %v111, %v126
    %v137 = vunpack.c.l.s4 1934713408
    %v138 = vunpack.c.0.s8 %v137
    %v139 = vlaneseq
    %v140 = vshrl.u32 %v139, 7
    %v141 = vsub.s32 %v138, %v140
    %v142 = vrot.slane %v134, %v141
    %v144 = vunpack.c.l.s4 1934713408
    %v145 = vunpack.c.0.s8 %v144
    %v146 = vlaneseq
    %v147 = vshrl.u32 %v146, 7
    %v148 = vsub.s32 %v145, %v147
    %v149 = vrot.slane %v135, %v148
    %v150 = vcombine.low %v118, %v133
    %v151 = vcombine.high %v118, %v133
    %v153 = vunpack.c.l.s4 1934713408
    %v154 = vunpack.c.0.s8 %v153
    %v155 = vlaneseq
    %v156 = vshrl.u32 %v155, 7
    %v157 = vsub.s32 %v154, %v156
    %v158 = vrot.slane %v150, %v157
    %v160 = vunpack.c.l.s4 1934713408
    %v161 = vunpack.c.0.s8 %v160
    %v162 = vlaneseq
    %v163 = vshrl.u32 %v162, 7
    %v164 = vsub.s32 %v161, %v163
    %v165 = vrot.slane %v151, %v164
    %v166 = vcombine.high %v142, 0.0
    %v167 = vcombine.high %v149, 0.0
    %v168 = vcombine.high %v158, 0.0
    %v169 = vcombine.high %v165, 0.0
    %v170 = vmul.f32 %v57, %v95
    %v171 = vmul.f32 %v68, %v99
    %v172 = vcombine.low %v170, %v171
    %v174 = vunpack.c.l.s4 1934713408
    %v175 = vunpack.c.0.s8 %v174
    %v176 = vlaneseq
    %v177 = vshrl.u32 %v176, 7
    %v178 = vsub.s32 %v175, %v177
    %v179 = vrot.slane %v172, %v178
    %181 = vrot.lane.b32.xlu0 %v166, 8
    %v182 = vpop.permute.xlu0 %181
    %185 = vrot.lane.b32.xlu0 %v149, 16
    %v186 = vpop.permute.xlu0 %185
    %189 = vrot.lane.b32.xlu0 %v167, 24
    %v190 = vpop.permute.xlu0 %189
    %193 = vrot.lane.b32.xlu0 %v158, 32
    %v194 = vpop.permute.xlu0 %193
    %197 = vrot.lane.b32.xlu0 %v168, 40
    %v198 = vpop.permute.xlu0 %197
    %201 = vrot.lane.b32.xlu0 %v165, 48
    %v202 = vpop.permute.xlu0 %201
    %205 = vrot.lane.b32.xlu0 %v169, 56
    %v206 = vpop.permute.xlu0 %205
    %209 = vrot.lane.b32.xlu0 %v179, 64
    %v210 = vpop.permute.xlu0 %209
    %vm212 = vcmask 64512
    %v213 = vsel %vm212, %v142, %v182
    %vm214 = vcmask 130048
    %v215 = vsel %vm214, %v213, %v186
    %vm216 = vcmask 195584
    %v217 = vsel %vm216, %v215, %v190
    %vm218 = vcmask 261120
    %v219 = vsel %vm218, %v217, %v194
    %vm220 = vcmask 326656
    %v221 = vsel %vm220, %v219, %v198
    %vm222 = vcmask 392192
    %v223 = vsel %vm222, %v221, %v202
    %vm224 = vcmask 457728
    %v225 = vsel %vm224, %v223, %v206
    %vm226 = vcmask 523264
    %v227 = vsel %vm226, %v225, %v210
    %v228 = vpack.c.bf16 %v227, %v227
    %v229 = vld [vmem:[#allocation5] sm:$0xff]
    %v230 = vld [vmem:[#allocation5 + $0x8] sm:$0xff]
    %v231 = vld [vmem:[#allocation5 + $0x10] sm:$0xff]
    %v232 = vld [vmem:[#allocation5 + $0x18] sm:$0xff]
    %v233 = vld [vmem:[#allocation5 + $0x20] sm:$0xff]
    %v234 = vld [vmem:[#allocation5 + $0x28] sm:$0xff]
    %v235 = vld [vmem:[#allocation5 + $0x30] sm:$0xff]
    %v236 = vld [vmem:[#allocation5 + $0x38] sm:$0xff]
    %v237 = vld [vmem:[#allocation5 + $0x40] sm:$0xff]
    %v238 = vld [vmem:[#allocation5 + $0x48] sm:$0xff]
    %v239 = vld [vmem:[#allocation5 + $0x50] sm:$0xff]
    %v240 = vld [vmem:[#allocation5 + $0x58] sm:$0xff]
    %v241 = vld [vmem:[#allocation5 + $0x60] sm:$0xff]
    %v242 = vld [vmem:[#allocation5 + $0x68] sm:$0xff]
    %v243 = vld [vmem:[#allocation5 + $0x70] sm:$0xff]
    %v244 = vld [vmem:[#allocation5 + $0x78] sm:$0xff]
    %v245 = vld [vmem:[#allocation5 + $0x80] sm:$0xff]
    %v246 = vld [vmem:[#allocation5 + $0x88] sm:$0xff]
    %v247 = vld [vmem:[%s3] sm:$0xf]
    %v249 = vlaneseq
    %v250 = vshrl.u32 %v249, 7
    %v251 = vsub.s32 0, %v250
    %v252 = vrot.slane %v247, %v251
    %v253 = vlaneseq
    %v254 = vshrl.u32 %v253, 7
    %v255 = vsub.s32 1, %v254
    %v256 = vrot.slane %v247, %v255
    %v257 = vlaneseq
    %v258 = vshrl.u32 %v257, 7
    %v259 = vsub.s32 2, %v258
    %v260 = vrot.slane %v247, %v259
    %v261 = vlaneseq
    %v262 = vshrl.u32 %v261, 7
    %v263 = vsub.s32 3, %v262
    %v264 = vrot.slane %v247, %v263
    %v287 = vunpack.c.l.b16 %v229
    %v288 = vunpack.c.h.b16 %v229
    %v289 = vunpack.c.l.b16 %v230
    %v290 = vunpack.c.h.b16 %v230
    %v291 = vunpack.c.l.b16 %v231
    %v292 = vunpack.c.h.b16 %v231
    %v293 = vunpack.c.l.b16 %v232
    %v294 = vunpack.c.h.b16 %v232
    %v295 = vunpack.c.l.b16 %v233
    %v296 = vunpack.c.h.b16 %v233
    %v297 = vunpack.c.l.b16 %v234
    %v298 = vunpack.c.h.b16 %v234
    %v299 = vunpack.c.l.b16 %v235
    %v300 = vunpack.c.h.b16 %v235
    %v301 = vunpack.c.l.b16 %v236
    %v302 = vunpack.c.h.b16 %v236
    %v303 = vunpack.c.l.b16 %v237
    %v304 = vunpack.c.h.b16 %v237
    %v305 = vunpack.c.l.b16 %v238
    %v306 = vunpack.c.h.b16 %v238
    %v307 = vunpack.c.l.b16 %v239
    %v308 = vunpack.c.h.b16 %v239
    %v309 = vunpack.c.l.b16 %v240
    %v310 = vunpack.c.h.b16 %v240
    %v311 = vunpack.c.l.b16 %v241
    %v312 = vunpack.c.h.b16 %v241
    %v313 = vunpack.c.l.b16 %v242
    %v314 = vunpack.c.h.b16 %v242
    %v315 = vunpack.c.l.b16 %v243
    %v316 = vunpack.c.h.b16 %v243
    %v317 = vunpack.c.l.b16 %v244
    %v318 = vunpack.c.h.b16 %v244
    %v319 = vunpack.c.l.b16 %v245
    %v320 = vunpack.c.h.b16 %v245
    %v321 = vunpack.c.l.b16 %v246
    %v322 = vunpack.c.h.b16 %v246
    %v323 = vpack.c.b16 %v291, %v287
    %v324 = vpack.c.b16 %v292, %v288
    %v325 = vpack.c.b16 %v293, %v289
    %v326 = vpack.c.b16 %v294, %v290
    %v327 = vpack.c.b16 %v299, %v295
    %v328 = vpack.c.b16 %v300, %v296
    %v329 = vpack.c.b16 %v301, %v297
    %v330 = vpack.c.b16 %v302, %v298
    %v331 = vpack.c.b16 %v307, %v303
    %v332 = vpack.c.b16 %v308, %v304
    %v333 = vpack.c.b16 %v309, %v305
    %v334 = vpack.c.b16 %v310, %v306
    %v335 = vpack.c.b16 %v315, %v311
    %v336 = vpack.c.b16 %v316, %v312
    %v337 = vpack.c.b16 %v317, %v313
    %v338 = vpack.c.b16 %v318, %v314
    %v339 = vpack.c.b16 %v319, %v319
    %v340 = vpack.c.b16 %v320, %v320
    %v341 = vpack.c.b16 %v321, %v321
    %v342 = vpack.c.b16 %v322, %v322
    %vm359 = vcmask 588800
    %v361 = vsel %vm359, %v228, 0
    %vm363 = vcmask 1043456
    %v365 = vsel %vm363, %v339, 0
    %v368 = vsel %vm363, %v340, 0
    %v371 = vsel %vm363, %v341, 0
    %v374 = vsel %vm363, %v342, 0
    %376 = vmatprep.subr.bf16.mxu0 %v324
    %377 = vmatpush1.bf16.msra.mxu0 %v323
    %378 = vmatprep.subr.bf16.mxu0 %v328
    %379 = vmatpush1.bf16.msra.mxu0 %v327
    %380 = vmatprep.subr.bf16.mxu0 %v332
    %381 = vmatpush1.bf16.msra.mxu0 %v331
    %382 = vmatprep.subr.bf16.mxu0 %v336
    %383 = vmatpush1.bf16.msra.mxu0 %v335
    %384 = vmatprep.subr.bf16.mxu0 %v368
    %385 = vmatpush1.bf16.msra.mxu0 %v365
    %386 = vmatprep.subr.bf16.mxu0 0
    %387 = vmatpush1.bf16.msra.mxu0 0
    %388 = vmatprep.subr.bf16.mxu0 0
    %389 = vmatpush1.bf16.msra.mxu0 0
    %390 = vmatprep.subr.bf16.mxu0 0
    %391 = vmatpush1.bf16.msra.mxu0 0
    %392 = vmatprep.subr.bf16.mxu0 0
    %393 = vmatpush1.bf16.msra.mxu0 0
    %394 = vmatprep.subr.bf16.mxu0 0
    %395 = vmatpush1.bf16.msra.mxu0 0
    %396 = vmatprep.subr.bf16.mxu0 0
    %397 = vmatpush1.bf16.msra.mxu0 0
    %398 = vmatprep.subr.bf16.mxu0 0
    %399 = vmatpush1.bf16.msra.mxu0 0
    %400 = vmatprep.subr.bf16.mxu0 0
    %401 = vmatpush1.bf16.msra.mxu0 0
    %402 = vmatprep.subr.bf16.mxu0 0
    %403 = vmatpush1.bf16.msra.mxu0 0
    %404 = vmatprep.subr.bf16.mxu0 0
    %405 = vmatpush1.bf16.msra.mxu0 0
    %406 = vmatprep.subr.bf16.mxu0 0
    %407 = vmatpush1.bf16.msra.mxu0 0
    %408 = vmatprep.mubr.bf16.mxu0 0
    %409 = vmatmul.mubr.bf16.gmra.mrb[0].mxu0 %v361
    %v410 = vpop.f32.mrb[0].mxu0
    %v411 = vadd.f32 %v252, %v410
    %v412 = vpop.f32.mrb[0].mxu0
    %v413 = vadd.f32 %v256, %v412
    %v414 = vpop.f32.mrb[0].mxu0
    %v415 = vpop.f32.mrb[0].mxu0
    %416 = vdwg.mxu0
    %417 = vmatprep.subr.bf16.mxu0 %v326
    %418 = vmatpush1.bf16.msra.mxu0 %v325
    %419 = vmatprep.subr.bf16.mxu0 %v330
    %420 = vmatpush1.bf16.msra.mxu0 %v329
    %421 = vmatprep.subr.bf16.mxu0 %v334
    %422 = vmatpush1.bf16.msra.mxu0 %v333
    %423 = vmatprep.subr.bf16.mxu0 %v338
    %424 = vmatpush1.bf16.msra.mxu0 %v337
    %425 = vmatprep.subr.bf16.mxu0 %v374
    %426 = vmatpush1.bf16.msra.mxu0 %v371
    %427 = vmatprep.subr.bf16.mxu0 0
    %428 = vmatpush1.bf16.msra.mxu0 0
    %429 = vmatprep.subr.bf16.mxu0 0
    %430 = vmatpush1.bf16.msra.mxu0 0
    %431 = vmatprep.subr.bf16.mxu0 0
    %432 = vmatpush1.bf16.msra.mxu0 0
    %433 = vmatprep.subr.bf16.mxu0 0
    %434 = vmatpush1.bf16.msra.mxu0 0
    %435 = vmatprep.subr.bf16.mxu0 0
    %436 = vmatpush1.bf16.msra.mxu0 0
    %437 = vmatprep.subr.bf16.mxu0 0
    %438 = vmatpush1.bf16.msra.mxu0 0
    %439 = vmatprep.subr.bf16.mxu0 0
    %440 = vmatpush1.bf16.msra.mxu0 0
    %441 = vmatprep.subr.bf16.mxu0 0
    %442 = vmatpush1.bf16.msra.mxu0 0
    %443 = vmatprep.subr.bf16.mxu0 0
    %444 = vmatpush1.bf16.msra.mxu0 0
    %445 = vmatprep.subr.bf16.mxu0 0
    %446 = vmatpush1.bf16.msra.mxu0 0
    %447 = vmatprep.subr.bf16.mxu0 0
    %448 = vmatpush1.bf16.msra.mxu0 0
    %449 = vmatprep.mubr.bf16.mxu0 0
    %450 = vmatmul.mubr.bf16.gmra.mrb[0].mxu0 %v361
    %v451 = vpop.f32.mrb[0].mxu0
    %v452 = vadd.f32 %v260, %v451
    %v453 = vpop.f32.mrb[0].mxu0
    %v454 = vadd.f32 %v264, %v453
    %v455 = vpop.f32.mrb[0].mxu0
    %v456 = vpop.f32.mrb[0].mxu0
    %457 = vdwg.mxu0
    %v462 = vcombine.low %v411, %v413
    %v463 = vcombine.low %v452, %v454
    %v465 = vunpack.c.l.s4 1983009808
    %v466 = vunpack.c.0.s8 %v465
    %v467 = vlaneseq
    %v468 = vshrl.u32 %v467, 7
    %v469 = vsub.s32 %v466, %v468
    %v470 = vrot.slane %v462, %v469
    %v472 = vunpack.c.l.s4 1983009808
    %v473 = vunpack.c.0.s8 %v472
    %v474 = vlaneseq
    %v475 = vshrl.u32 %v474, 7
    %v476 = vsub.s32 %v473, %v475
    %v477 = vrot.slane %v463, %v476
    %v478 = vcombine.low %v470, %v477
    %480 = vst [vmem:[#allocation7] sm:$0xff] %v478
    // Predicated region
    $region26: #{tpu_custom_call.1} parent=1 // pred_check
      _
    $region27: #{tpu_custom_call.1} parent=1 // pred_check_branch
      %482 = sbr.rel (0) target = $region29
    $region28: #{tpu_custom_call.1} parent=1 // pred_region
      %s484 = ssub.s32 128, 128
      %485 = vsyncadd [#allocation4], %s484
      %s487 = sshll.u32 [#allocation7], 4
      %s488 = int_to_ptr.vmem [resolvable:$true] %s487
      %490 = dma.vmem_to_hbm [thread:$0]  %s488, 128, %s4, [#allocation4]
    $region29: #{tpu_custom_call.1} parent=1 // pred_fallthru
      _
    // Predicated region
    $region30: #{tpu_custom_call.1} parent=1 // pred_check
      _
    $region31: #{tpu_custom_call.1} parent=1 // pred_check_branch
      %492 = sbr.rel (0) target = $region33
    $region32: #{tpu_custom_call.1} parent=1 // pred_region
      %493 = dma.done [#allocation4], 128
    $region33: #{tpu_custom_call.1} parent=1 // pred_fallthru
      _
    %494 = vsyncpa [#allocation3], 1
    %495 = vsyncpa [#allocation6], 1
    %496 = vsyncpa [#allocation4], 1

</llo_original>
